<compile_context>
chip_gen: v5e
topology: v5e:2x2
jax: 0.10.0
libtpu: 0.0.40
codegen_flags: <defaults>
</compile_context>

<pallas_src>
import functools

import jax
import jax.numpy as jnp
from jax import lax
from jax.experimental import pallas as pl
from jax.experimental.pallas import tpu as pltpu


def _round_up(x, m):
    return (x + m - 1) // m * m


def _vmem_capacity_bytes():
    """Physical VMEM per TensorCore; conservative default if unqueryable."""
    try:
        return int(pltpu.get_tpu_info().vmem_capacity_bytes)
    except Exception:
        return 64 * 1024 * 1024          # v7x per-core size: safe everywhere


# --------------------------------------------------------------------------
# Fused single-pass kernel: one batch element per grid step.
# --------------------------------------------------------------------------
def _cab_fused_kernel(gamma_ref, x_ref, o_ref, *, matmul_dtype):
    x = x_ref[0]                                             # (C, N) f32
    xm = x.astype(matmul_dtype)
    # aff[i, j] = sum_n x[i, n] * x[j, n]   (trans-b contraction, no x^T copy)
    aff = lax.dot_general(xm, xm, (((1,), (1,)), ((), ())),
                          preferred_element_type=jnp.float32)        # (C, C)
    # softmax(rowmax(aff) - aff) == exp(rowmin(aff) - aff) / sum(...)
    e = jnp.exp(jnp.min(aff, axis=-1, keepdims=True) - aff)
    # gamma folded into the normalizer: p = gamma * softmax(...)
    p = e * (gamma_ref[0] / jnp.sum(e, axis=-1, keepdims=True))
    w = lax.dot_general(p.astype(matmul_dtype), xm,
                        (((1,), (0,)), ((), ())),
                        preferred_element_type=jnp.float32)          # (C, N)
    o_ref[0] = (x + w).astype(o_ref.dtype)


# --------------------------------------------------------------------------
# Two-pass fallback for slabs that do not fit VMEM.
# --------------------------------------------------------------------------
def _cab_affinity_kernel(gamma_ref, x_ref, p_ref, acc_ref, *,
                         matmul_dtype, n_total, tn):
    """Pass 1: accumulate aff over spatial tiles; softmax * gamma at the end."""
    k = pl.program_id(1)
    x = x_ref[0]                                             # (C, tn) f32
    if n_total % tn:
        # The tail tile extends past N; out-of-range columns hold undefined
        # data, so zero them (they must contribute nothing to aff).
        col = lax.broadcasted_iota(jnp.int32, x.shape, 1)
        x = jnp.where(col < n_total - k * tn, x, 0.0)
    xm = x.astype(matmul_dtype)
    part = lax.dot_general(xm, xm, (((1,), (1,)), ((), ())),
                           preferred_element_type=jnp.float32)       # (C, C)

    @pl.when(k == 0)
    def _store():
        acc_ref[...] = part

    @pl.when(k > 0)
    def _accumulate():
        acc_ref[...] += part

    @pl.when(k == pl.num_programs(1) - 1)
    def _softmax():
        aff = acc_ref[...]
        e = jnp.exp(jnp.min(aff, axis=-1, keepdims=True) - aff)
        p = e * (gamma_ref[0] / jnp.sum(e, axis=-1, keepdims=True))
        p_ref[0] = p.astype(p_ref.dtype)                     # written once


def _cab_apply_kernel(p_ref, x_ref, o_ref, *, matmul_dtype):
    """Pass 2: out_tile = x_tile + (gamma*p) @ x_tile  (gamma already folded)."""
    x = x_ref[0]                                             # (C, tn) f32
    w = lax.dot_general(p_ref[0], x.astype(matmul_dtype),
                        (((1,), (0,)), ((), ())),
                        preferred_element_type=jnp.float32)
    o_ref[0] = (x + w).astype(o_ref.dtype)


# --------------------------------------------------------------------------
# Wrapper
# --------------------------------------------------------------------------
def channel_attention_block(x, gamma, *, matmul_dtype=jnp.float32,
                            force_two_pass=False, tn=None):
    """x: (B, C, H, W) float32; gamma: (1,) float32. Returns (B, C, H, W)."""
    B, C, H, W = x.shape
    N = H * W
    x_flat = x.reshape(B, C, N)                              # glue: view(B, C, -1)
    gamma = jnp.asarray(gamma, jnp.float32).reshape((1,))

    vmem_cap = _vmem_capacity_bytes()
    vmem_limit = int(vmem_cap * 0.65)        # headroom for Mosaic internal scratch

    def _params(sem):
        return pltpu.CompilerParams(dimension_semantics=sem,
                                    vmem_limit_bytes=vmem_limit)

    # Fused-path VMEM estimate: double-buffered in/out slabs + w + cast copy
    # + the (C, C) affinity/softmax temporaries.
    fused_bytes = 6 * C * N * 4 + 16 * C * C
    if not force_two_pass and fused_bytes <= vmem_limit:
        out_flat = pl.pallas_call(
            functools.partial(_cab_fused_kernel, matmul_dtype=matmul_dtype),
            out_shape=jax.ShapeDtypeStruct((B, C, N), x.dtype),
            grid=(B,),
            in_specs=[pl.BlockSpec(memory_space=pltpu.MemorySpace.SMEM),  # gamma
                      pl.BlockSpec((1, C, N), lambda b: (b, 0, 0))],
            out_specs=pl.BlockSpec((1, C, N), lambda b: (b, 0, 0)),
            compiler_params=_params(("parallel",)),
        )(gamma, x_flat)
        return out_flat.reshape(B, C, H, W)

    # ---- two-pass fallback (large C*N) ------------------------------------
    if tn is None:
        # Pass-2 per-step footprint ~ 24*C*tn bytes (double-buffered f32
        # in/out tiles + w + cast); keep it within half the budget.
        budget_tn = max(128, ((vmem_limit // 2) // (24 * C)) // 128 * 128)
        tn = min(budget_tn, 4096, _round_up(N, 128))
    nt = pl.cdiv(N, tn)

    # Pass 1: p = gamma * softmax(rowmax(aff) - aff), aff accumulated over N.
    p = pl.pallas_call(
        functools.partial(_cab_affinity_kernel, matmul_dtype=matmul_dtype,
                          n_total=N, tn=tn),
        out_shape=jax.ShapeDtypeStruct((B, C, C), matmul_dtype),
        grid=(B, nt),
        in_specs=[pl.BlockSpec(memory_space=pltpu.MemorySpace.SMEM),      # gamma
                  pl.BlockSpec((1, C, tn), lambda b, k: (b, 0, k))],
        out_specs=pl.BlockSpec((1, C, C), lambda b, k: (b, 0, 0)),
        scratch_shapes=[pltpu.VMEM((C, C), jnp.float32)],
        compiler_params=_params(("parallel", "arbitrary")),
    )(gamma, x_flat)

    # Pass 2: out = x + p @ x, streamed over lane-dense spatial tiles.
    out_flat = pl.pallas_call(
        functools.partial(_cab_apply_kernel, matmul_dtype=matmul_dtype),
        out_shape=jax.ShapeDtypeStruct((B, C, N), x.dtype),
        grid=(B, nt),
        in_specs=[pl.BlockSpec((1, C, C), lambda b, k: (b, 0, 0)),
                  pl.BlockSpec((1, C, tn), lambda b, k: (b, 0, k))],
        out_specs=pl.BlockSpec((1, C, tn), lambda b, k: (b, 0, k)),
        compiler_params=_params(("parallel", "parallel")),
    )(p, x_flat)
    return out_flat.reshape(B, C, H, W)


def _reference(x, gamma, matmul_dtype=jnp.float32):
    """Pure-JAX reference matching the PyTorch module; optional bf16 operands."""
    B, C, H, W = x.shape
    g = jnp.asarray(gamma, jnp.float32).reshape(())
    q = x.reshape(B, C, -1).astype(matmul_dtype)
    aff = jnp.matmul(q, jnp.swapaxes(q, 1, 2),
                     precision=lax.Precision.HIGHEST,
                     preferred_element_type=jnp.float32)
    aff_new = jnp.max(aff, axis=-1, keepdims=True) - aff
    p = jax.nn.softmax(aff_new, axis=-1)
    w = jnp.matmul(p.astype(matmul_dtype), q,
                   precision=lax.Precision.HIGHEST,
                   preferred_element_type=jnp.float32).astype(jnp.float32)
    return g * w.reshape(B, C, H, W) + x


if __name__ == "__main__":
    key = jax.random.PRNGKey(0)
    B, C, H, W = 2, 4, 16, 16
    # Moderate magnitude keeps the affinity logits O(10), so precision-mode
    # differences between the kernel's and the reference's matmuls stay well
    # inside the comparison tolerance after the softmax.
    x = 0.2 * jax.random.normal(key, (B, C, H, W), dtype=jnp.float32)

    gamma0 = jnp.zeros((1,), dtype=jnp.float32)      # nn.Parameter(torch.zeros(1))
    gamma = jnp.array([0.5], dtype=jnp.float32)

    # gamma == 0: output must equal the input exactly (p is scaled to zero).
    out0 = jax.block_until_ready(channel_attention_block(x, gamma0))
    assert out0.shape == (B, C, H, W)
    assert jnp.allclose(out0, x, atol=1e-6), "gamma=0 residual mismatch"

    ref = _reference(x, gamma)

    # Fused single-pass path (default), f32 operands.
    out = jax.block_until_ready(channel_attention_block(x, gamma))
    assert jnp.allclose(out, ref, atol=2e-2, rtol=2e-2), "fused f32 mismatch"

    # bf16 operands (f32 MXU accumulation) vs a matching-precision reference.
    out_bf16 = jax.block_until_ready(
        channel_attention_block(x, gamma, matmul_dtype=jnp.bfloat16))
    ref_bf16 = _reference(x, gamma, matmul_dtype=jnp.bfloat16)
    assert jnp.allclose(out_bf16, ref_bf16, atol=2e-2, rtol=2e-2), "bf16 mismatch"

    # Forced two-pass fallback with a multi-tile spatial reduction (N=256, tn=128).
    out_2p = jax.block_until_ready(
        channel_attention_block(x, gamma, force_two_pass=True, tn=128))
    assert jnp.allclose(out_2p, ref, atol=2e-2, rtol=2e-2), "two-pass mismatch"

    # Ragged spatial size (N = 144, not a multiple of 128): fused path and the
    # two-pass path's in-kernel tail masking (no XLA pad / slice involved).
    x2 = 0.2 * jax.random.normal(jax.random.PRNGKey(1), (B, C, 12, 12),
                                 dtype=jnp.float32)
    ref2 = _reference(x2, gamma)
    out2 = jax.block_until_ready(channel_attention_block(x2, gamma))
    assert jnp.allclose(out2, ref2, atol=2e-2, rtol=2e-2), "fused ragged-N mismatch"
    out2_2p = jax.block_until_ready(
        channel_attention_block(x2, gamma, force_two_pass=True, tn=128))
    assert jnp.allclose(out2_2p, ref2, atol=2e-2, rtol=2e-2), "two-pass ragged-N mismatch"

    print("KERNEL_OK")
</pallas_src>

<mosaic_0001>
module attributes {stable_mosaic.version = 11 : i64} {
  func.func @_cab_fused_kernel(%arg0: i32, %arg1: memref<1xf32, #tpu.memory_space<smem>>, %arg2: memref<1x4x256xf32, #tpu.memory_space<vmem>>, %arg3: memref<1x4x256xf32, #tpu.memory_space<vmem>>) attributes {dimension_semantics = [#tpu.dimension_semantics<parallel>], iteration_bounds = array<i64: 2>, scalar_prefetch = 0 : i64, scratch_operands = 0 : i64, tpu.core_type = #tpu.core_type<tc>, window_params = [{transform_indices = @transform_0, window_bounds = array<i64: 1>}, {transform_indices = @transform_1, window_bounds = array<i64: 1, 4, 256>}, {transform_indices = @transform_2, window_bounds = array<i64: 1, 4, 256>}]} {
    %c0 = arith.constant 0 : index
    %c0_0 = arith.constant 0 : index
    %c0_1 = arith.constant 0 : index
    %0 = vector.load %arg2[%c0, %c0_0, %c0_1] : memref<1x4x256xf32, #tpu.memory_space<vmem>>, vector<1x4x256xf32>
    %1 = vector.shape_cast %0 : vector<1x4x256xf32> to vector<4x256xf32>
    %cst = arith.constant dense<0.000000e+00> : vector<4x4xf32>
    %2 = tpu.matmul %1, %1, %cst {dimension_numbers = #tpu.dot_dimension_numbers<[1], [1], [0], [0], [0, 0, 1, 0], [], []>} : vector<4x256xf32>, vector<4x256xf32>, vector<4x4xf32> -> vector<4x4xf32>
    %cst_2 = arith.constant dense<0x7F800000> : vector<4xf32>
    %3 = vector.multi_reduction <minimumf>, %2, %cst_2 [1] : vector<4x4xf32> to vector<4xf32>
    %4 = vector.shape_cast %3 : vector<4xf32> to vector<4x1xf32>
    %5 = vector.broadcast %4 : vector<4x1xf32> to vector<4x4xf32>
    %6 = arith.subf %5, %2 : vector<4x4xf32>
    %7 = math.exp %6 : vector<4x4xf32>
    %c0_3 = arith.constant 0 : index
    %8 = memref.load %arg1[%c0_3] : memref<1xf32, #tpu.memory_space<smem>>
    %cst_4 = arith.constant dense<0.000000e+00> : vector<4xf32>
    %9 = vector.multi_reduction <add>, %7, %cst_4 [1] : vector<4x4xf32> to vector<4xf32>
    %10 = vector.shape_cast %9 : vector<4xf32> to vector<4x1xf32>
    %11 = vector.broadcast %8 : f32 to vector<4x1xf32>
    %12 = arith.divf %11, %10 : vector<4x1xf32>
    %13 = vector.broadcast %12 : vector<4x1xf32> to vector<4x4xf32>
    %14 = arith.mulf %7, %13 : vector<4x4xf32>
    %cst_5 = arith.constant dense<0.000000e+00> : vector<4x256xf32>
    %15 = tpu.matmul %14, %1, %cst_5 {dimension_numbers = #tpu.dot_dimension_numbers<[1], [0], [0], [1], [0, 0, 1, 1], [], []>} : vector<4x4xf32>, vector<4x256xf32>, vector<4x256xf32> -> vector<4x256xf32>
    %16 = arith.addf %1, %15 : vector<4x256xf32>
    %c0_6 = arith.constant 0 : index
    %c0_7 = arith.constant 0 : index
    %c0_8 = arith.constant 0 : index
    %17 = vector.load %arg3[%c0_6, %c0_7, %c0_8] : memref<1x4x256xf32, #tpu.memory_space<vmem>>, vector<1x4x256xf32>
    %18 = vector.shape_cast %17 : vector<1x4x256xf32> to vector<4x256xf32>
    %19 = vector.shape_cast %16 : vector<4x256xf32> to vector<1x4x256xf32>
    tpu.vector_store %arg3[%c0_6, %c0_7, %c0_8], %19 {strides = array<i32>} : memref<1x4x256xf32, #tpu.memory_space<vmem>>, vector<1x4x256xf32>,
    return
  }
  func.func @transform_0(%arg0: i32) -> i32 {
    %c0_i32 = arith.constant 0 : i32
    %c0_i32_0 = arith.constant 0 : i32
    return %c0_i32 : i32
  }
  func.func @transform_1(%arg0: i32) -> (i32, i32, i32) {
    %c0_i32 = arith.constant 0 : i32
    %c0_i32_0 = arith.constant 0 : i32
    %c0_i32_1 = arith.constant 0 : i32
    return %arg0, %c0_i32, %c0_i32_0 : i32, i32, i32
  }
  func.func @transform_2(%arg0: i32) -> (i32, i32, i32) {
    %c0_i32 = arith.constant 0 : i32
    %c0_i32_0 = arith.constant 0 : i32
    %c0_i32_1 = arith.constant 0 : i32
    return %arg0, %c0_i32, %c0_i32_0 : i32, i32, i32
  }
}

</mosaic_0001>

<llo_original>
// kernel: tpu_custom_call.1
$region0: #{tpu_custom_call.1}
  #allocation0 [shape = 'u32[]', space=smem, size = 0x4, offset = 0x4, fixed_abs, tag = 'smem constant byte address 0x4 - core index']
  #allocation1 [shape = 'u32[72,128]{1,0:T(1,128)}', space=vmem, size = 0x9000, scoped, tag = 'internal scratch']
  #allocation2 [shape = 'f32[1]{0:T(128)S(6)}', space=smem, size = 0x200, scoped, tag = 'scoped memory for tpu_custom_call.1']
  %s0 = inlined_call_operand.<no memory space> [shape: f32[1], index: 0, kind: input, shape index: {}]
  %s1 = inlined_call_operand.hbm [shape: f32[2,4,256], index: 1, kind: input, shape index: {}]
  %s2 = inlined_call_operand.hbm [shape: f32[2,4,256], index: 2, kind: output, shape index: {}]
  %s3 = sld [smem:[#allocation0]]
  $region45: #{tpu_custom_call.1} parent=0
    _
  %s5 = ssub.s32 1, %s3
  %s6 = scalar_select 0, %s5, %s3
  %7 = sst [smem:[#allocation2]] %s0
  $region1: #{tpu_custom_call.1} parent=0
    #allocation3 [shape = 'u8[8192]{0}', space=vmem, size = 0x2000, scoped, tag = 'input window, operand 1']
    #allocation4 [shape = 's32[2]{0}', space=sflag, size = 0x8, scoped, tag = 'scoped memory for tpu_custom_call.1']
    #allocation5 [shape = 's32[2]{0}', space=sflag, size = 0x8, scoped, tag = 'scoped memory for tpu_custom_call.1']
    #allocation6 [shape = 'u8[8192]{0}', space=vmem, size = 0x2000, scoped, tag = 'output window, operand 0']
    %8 = vsyncpa [#allocation4], 0
    %s9 = scalar_lea.sflag [#allocation4], 1
    %10 = vsyncpa %s9, 0
    %11 = vsyncpa [#allocation5], 0
    %s12 = scalar_lea.sflag [#allocation5], 1
    %13 = vsyncpa %s12, 0
    loop: start=0, step=1, limit=4
    $region2: #{tpu_custom_call.1} parent=1 // loop_pre_header
      _
    $region3: #{tpu_custom_call.1} parent=1 // loop_header
      %s15 = sphi 0, %s19
      %p16 = scmp.ge.s32.totalorder %s15, 4
      %s23 = sphi 0, %s23
      %s25 = sphi 0, %s23
      %s26 = sphi 0, %s25
      %s40 = sphi 0, %s26
      %s46 = sphi 0, %s48
      %s49 = sphi 0, %s46
      %s50 = sphi 0, %s49
      %s66 = sphi 0, %s50
      %s72 = sphi 0, %s74
      %s75 = sphi 0, %s72
      %s76 = sphi 0, %s75
      %s92 = sphi 0, %s76
    $region4: #{tpu_custom_call.1} parent=1 // loop_header_branch
      %18 = sbr.rel (%p16) target = $region8
    $region5: #{tpu_custom_call.1} parent=1 // loop_body
      %s20 = ssub.s32 %s15, 1
      %s21 = ssub.s32 %s15, 2
      %s22 = sadd.s32 %s15, 1
      %s24 = sadd.s32 %s23, 1
      %p27 = scmp.eq.s32.totalorder %s15, 1
      %p28 = scmp.ne.s32.totalorder %s23, %s25
      %p29 = scmp.eq.s32.totalorder %s15, 0
      %p30 = por %p28, %p29
      %p31 = scmp.ne.s32.totalorder %s23, %s25
      %p32 = scmp.eq.s32.totalorder %s20, 1
      %p33 = por %p31, %p32
      %p34 = scmp.ne.s32.totalorder %s25, %s26
      %p35 = scmp.eq.s32.totalorder %s20, 0
      %p36 = por %p34, %p35
      %p37 = scmp.ne.s32.totalorder %s25, %s26
      %p38 = scmp.eq.s32.totalorder %s21, 1
      %p39 = por %p37, %p38
      %p41 = scmp.ne.s32.totalorder %s26, %s40
      %p42 = scmp.eq.s32.totalorder %s21, 0
      %p43 = por %p41, %p42
      %s44 = ssub.s32 %s15, %s22
      %p45 = scmp.eq.s32.totalorder %s44, 0
      %s47 = sadd.s32 %s46, 1
      %s48 = scalar_select %p45, %s46, %s47
      %p51 = pneg %p45
      %p52 = scmp.eq.s32.totalorder %s15, 1
      %p53 = por %p51, %p52
      %p54 = scmp.ne.s32.totalorder %s46, %s49
      %p55 = scmp.eq.s32.totalorder %s15, 0
      %p56 = por %p54, %p55
      %p57 = scmp.ne.s32.totalorder %s46, %s49
      %p58 = scmp.eq.s32.totalorder %s20, 1
      %p59 = por %p57, %p58
      %p60 = scmp.ne.s32.totalorder %s49, %s50
      %p61 = scmp.eq.s32.totalorder %s20, 0
      %p62 = por %p60, %p61
      %p63 = scmp.ne.s32.totalorder %s49, %s50
      %p64 = scmp.eq.s32.totalorder %s21, 1
      %p65 = por %p63, %p64
      %p67 = scmp.ne.s32.totalorder %s50, %s66
      %p68 = scmp.eq.s32.totalorder %s21, 0
      %p69 = por %p67, %p68
      %s70 = ssub.s32 %s15, %s22
      %p71 = scmp.eq.s32.totalorder %s70, 0
      %s73 = sadd.s32 %s72, 1
      %s74 = scalar_select %p71, %s72, %s73
      %p77 = pneg %p71
      %p78 = scmp.eq.s32.totalorder %s15, 1
      %p79 = por %p77, %p78
      %p80 = scmp.ne.s32.totalorder %s72, %s75
      %p81 = scmp.eq.s32.totalorder %s15, 0
      %p82 = por %p80, %p81
      %p83 = scmp.ne.s32.totalorder %s72, %s75
      %p84 = scmp.eq.s32.totalorder %s20, 1
      %p85 = por %p83, %p84
      %p86 = scmp.ne.s32.totalorder %s75, %s76
      %p87 = scmp.eq.s32.totalorder %s20, 0
      %p88 = por %p86, %p87
      %p89 = scmp.ne.s32.totalorder %s75, %s76
      %p90 = scmp.eq.s32.totalorder %s21, 1
      %p91 = por %p89, %p90
      %p93 = scmp.ne.s32.totalorder %s76, %s92
      %p94 = scmp.eq.s32.totalorder %s21, 0
      %p95 = por %p93, %p94
      %p96 = scmp.le.s32.totalorder 1, %s15
      %p97 = scmp.lt.s32.totalorder %s15, 3
      %p98 = pnand %p96, %p97
      %p99 = pneg %p98
      // Predicated region
      $region9: #{tpu_custom_call.1} parent=5 // pred_check
        _
      $region10: #{tpu_custom_call.1} parent=5 // pred_check_branch
        %101 = sbr.rel (%p98) target = $region12
      $region11: #{tpu_custom_call.1} parent=5 // pred_region
        %s102 = ssub.s32 %s15, 1
        // Predicated region
        $region13: #{tpu_custom_call.1} parent=11 // pred_check
          %p103 = pneg %p36
        $region14: #{tpu_custom_call.1} parent=11 // pred_check_branch
          %105 = sbr.rel (%p103) target = $region16
        $region15: #{tpu_custom_call.1} parent=11 // pred_region
          _
        $region16: #{tpu_custom_call.1} parent=11 // pred_fallthru
          _
      $region12: #{tpu_custom_call.1} parent=5 // pred_fallthru
        _
      %p106 = scmp.lt.s32.totalorder %s15, 2
      // Predicated region
      $region17: #{tpu_custom_call.1} parent=5 // pred_check
        %p107 = pneg %p106
      $region18: #{tpu_custom_call.1} parent=5 // pred_check_branch
        %109 = sbr.rel (%p107) target = $region20
      $region19: #{tpu_custom_call.1} parent=5 // pred_region
        // Predicated region
        $region21: #{tpu_custom_call.1} parent=19 // pred_check
          %p110 = pneg %p56
        $region22: #{tpu_custom_call.1} parent=19 // pred_check_branch
          %112 = sbr.rel (%p110) target = $region24
        $region23: #{tpu_custom_call.1} parent=19 // pred_region
          %s113 = sand.u32 %s46, 1
          %s114 = scalar_lea.sflag [#allocation4], %s113
          %s115 = sand.u32 %s46, 1
          %s116 = smul.addr %s115, 8
          %s117 = scalar_lea.vmem [#allocation3], %s116
          %119 = vsyncadd %s114, 0
          %s120 = smul.addr %s15, 2
          %s121 = smul.addr %s120, 4
          %s122 = scalar_lea.hbm %s1, %s121
          %s124 = sshll.u32 %s122, 4
          %s125 = int_to_ptr.hbm [resolvable:$true] %s124
          %s126 = sshll.u32 %s117, 4
          %s127 = int_to_ptr.vmem [resolvable:$true] %s126
          %129 = dma.hbm_to_vmem [thread:$0]  %s125, 128, %s127, %s114
        $region24: #{tpu_custom_call.1} parent=19 // pred_fallthru
          _
      $region20: #{tpu_custom_call.1} parent=5 // pred_fallthru
        _
      %p130 = scmp.le.s32.totalorder 1, %s15
      %p131 = scmp.lt.s32.totalorder %s15, 3
      %p132 = pnand %p130, %p131
      %p133 = pneg %p132
      // Predicated region
      $region25: #{tpu_custom_call.1} parent=5 // pred_check
        _
      $region26: #{tpu_custom_call.1} parent=5 // pred_check_branch
        %135 = sbr.rel (%p132) target = $region28
      $region27: #{tpu_custom_call.1} parent=5 // pred_region
        %s136 = ssub.s32 %s15, 1
        %s137 = sand.u32 %s49, 1
        %s138 = scalar_lea.sflag [#allocation4], %s137
        %s139 = sand.u32 %s49, 1
        %s140 = smul.addr %s139, 8
        %s141 = scalar_lea.vmem [#allocation3], %s140
        // Predicated region
        $region29: #{tpu_custom_call.1} parent=27 // pred_check
          %p142 = pneg %p62
        $region30: #{tpu_custom_call.1} parent=27 // pred_check_branch
          %144 = sbr.rel (%p142) target = $region32
        $region31: #{tpu_custom_call.1} parent=27 // pred_region
          %146 = dma.done %s138, 128
        $region32: #{tpu_custom_call.1} parent=27 // pred_fallthru
          _
        %p147 = pneg %p36
        %p148 = pneg %p33
        %s149 = sand.u32 %s49, 1
        %s150 = scalar_lea.sflag [#allocation4], %s149
        %s151 = sand.u32 %s49, 1
        %s152 = smul.addr %s151, 8
        %s153 = scalar_lea.vmem [#allocation3], %s152
        %p154 = pneg %p62
        %p155 = pneg %p59
        %p156 = pneg %p88
        %p157 = pneg %p85
        %s158 = sand.u32 %s75, 1
        %s159 = scalar_lea.sflag [#allocation5], %s158
        %s160 = sand.u32 %s75, 1
        %s161 = smul.addr %s160, 8
        %s162 = scalar_lea.vmem [#allocation6], %s161
        %v163 = vld [vmem:[%s141] sm:$0xff]
        %165 = vst [vmem:[#allocation1] ss:$2 sm:$0xff] %v163
        %v166 = vld.sshfl [vmem:[#allocation1] sm:$0xff pattern:$0x75316420]
        %v167 = vld.sshfl [vmem:[#allocation1 + $0x8] sm:$0xff pattern:$0x75316420]
        %170 = vst [vmem:[#allocation1] ss:$2 sm:$0xff] %v163
        %v171 = vld.sshfl [vmem:[#allocation1] sm:$0xff pattern:$0x75316420]
        %v172 = vld.sshfl [vmem:[#allocation1 + $0x8] sm:$0xff pattern:$0x75316420]
        %175 = vmatpush.xpose.msra.mxu0 0.0
        %176 = vmatpush.xpose.msra.mxu0 0.0
        %177 = vmatpush.xpose.msra.mxu0 0.0
        %178 = vmatpush.xpose.msra.mxu0 0.0
        %179 = vmatpush.xpose.msra.mxu0 0.0
        %180 = vmatpush.xpose.msra.mxu0 0.0
        %181 = vmatpush.xpose.msra.mxu0 0.0
        %182 = vmatpush.xpose.msra.mxu0 0.0
        %183 = vmatpush.xpose.msra.mxu0 0.0
        %184 = vmatpush.xpose.msra.mxu0 0.0
        %185 = vmatpush.xpose.msra.mxu0 0.0
        %186 = vmatpush.xpose.msra.mxu0 0.0
        %187 = vmatpush.xpose.msra.mxu0 0.0
        %188 = vmatpush.xpose.msra.mxu0 0.0
        %189 = vmatpush.xpose.msra.mxu0 0.0
        %190 = vmatpush.xpose.msra.mxu0 %v171
        %191 = vmatmul.f32.gmra.mxu0 %v166
        %v192 = vpop.f32.mrf.mxu0
        %v193 = vadd.f32 0.0, %v192
        %194 = vdwg.mxu0
        %195 = vmatpush.xpose.msra.mxu0 0.0
        %196 = vmatpush.xpose.msra.mxu0 0.0
        %197 = vmatpush.xpose.msra.mxu0 0.0
        %198 = vmatpush.xpose.msra.mxu0 0.0
        %199 = vmatpush.xpose.msra.mxu0 0.0
        %200 = vmatpush.xpose.msra.mxu0 0.0
        %201 = vmatpush.xpose.msra.mxu0 0.0
        %202 = vmatpush.xpose.msra.mxu0 0.0
        %203 = vmatpush.xpose.msra.mxu0 0.0
        %204 = vmatpush.xpose.msra.mxu0 0.0
        %205 = vmatpush.xpose.msra.mxu0 0.0
        %206 = vmatpush.xpose.msra.mxu0 0.0
        %207 = vmatpush.xpose.msra.mxu0 0.0
        %208 = vmatpush.xpose.msra.mxu0 0.0
        %209 = vmatpush.xpose.msra.mxu0 0.0
        %210 = vmatpush.xpose.msra.mxu0 %v172
        %211 = vmatmul.f32.gmra.mxu0 %v167
        %v212 = vpop.f32.mrf.mxu0
        %v213 = vadd.f32 %v193, %v212
        %214 = vdwg.mxu0
        %vm215 = vcmask 27648
        %v216 = vsel %vm215, %v213, inf
        %217 = vmin.xlane.f32.xlu0 %v216
        %v218 = vpop.xlane.xlu0 %217
        %v219 = vsub.f32 %v218, %v213
        %v220 = vmul.f32 %v219, 1.442695
        %v221 = vpow.pop %v220
        %s222 = sld [smem:[#allocation2]]
        %v223 = vsel %vm215, %v221, 0.0
        %224 = vadd.xlane.f32.xlu0 %v223
        %v225 = vpop.xlane.xlu0 %224
        %v226 = vstv %s222
        %v227 = vrcp.pop %v225
        %v228 = vmul.f32 %v225, %v227
        %v229 = vsub.f32 1.0, %v228
        %v230 = vmul.f32 %v227, %v229
        %v231 = vadd.f32 %v227, %v230
        %vm232 = vweird.f32 %v225
        %vm233 = vweird.f32 %v227
        %vm234 = vmor %vm232, %vm233
        %v235 = vsel %vm234, %v227, %v231
        %v236 = vand.u32 2147483647, %v225
        %vm237 = vcmp.eq.f32.partialorder %v236, 8.507059e+37
        %v238 = vand.u32 %v225, 2147483648
        %v239 = vor.u32 1.1754944e-38, %v238
        %v240 = vsel %vm237, %v239, %v235
        %v241 = vmul.f32 %v226, %v240
        %v242 = vmul.f32 %v221, %v241
        %243 = vst [vmem:[#allocation1] ss:$2 sm:$0xff] %v163
        %v244 = vld.sshfl [vmem:[#allocation1] sm:$0xff pattern:$0x75316420]
        %v245 = vld.sshfl [vmem:[#allocation1 + $0x8] sm:$0xff pattern:$0x75316420]
        %vm246 = vcmask 31744
        %v248 = vsel %vm246, %v242, 0
        %vm250 = vcmask 1043456
        %v251 = vsel %vm250, %v244, 0
        %v253 = vsel %vm250, %v245, 0
        %255 = vmatpush.msra.mxu0 0.0
        %256 = vmatpush.msra.mxu0 0.0
        %257 = vmatpush.msra.mxu0 0.0
        %258 = vmatpush.msra.mxu0 0.0
        %259 = vmatpush.msra.mxu0 0.0
        %260 = vmatpush.msra.mxu0 0.0
        %261 = vmatpush.msra.mxu0 0.0
        %262 = vmatpush.msra.mxu0 0.0
        %263 = vmatpush.msra.mxu0 0.0
        %264 = vmatpush.msra.mxu0 0.0
        %265 = vmatpush.msra.mxu0 0.0
        %266 = vmatpush.msra.mxu0 0.0
        %267 = vmatpush.msra.mxu0 0.0
        %268 = vmatpush.msra.mxu0 0.0
        %269 = vmatpush.msra.mxu0 0.0
        %270 = vmatpush.msra.mxu0 %v251
        %271 = vmatmul.f32.gmra.mxu0 %v248
        %v272 = vpop.f32.mrf.mxu0
        %v273 = vadd.f32 0.0, %v272
        %274 = vdwg.mxu0
        %275 = vmatpush.msra.mxu0 0.0
        %276 = vmatpush.msra.mxu0 0.0
        %277 = vmatpush.msra.mxu0 0.0
        %278 = vmatpush.msra.mxu0 0.0
        %279 = vmatpush.msra.mxu0 0.0
        %280 = vmatpush.msra.mxu0 0.0
        %281 = vmatpush.msra.mxu0 0.0
        %282 = vmatpush.msra.mxu0 0.0
        %283 = vmatpush.msra.mxu0 0.0
        %284 = vmatpush.msra.mxu0 0.0
        %285 = vmatpush.msra.mxu0 0.0
        %286 = vmatpush.msra.mxu0 0.0
        %287 = vmatpush.msra.mxu0 0.0
        %288 = vmatpush.msra.mxu0 0.0
        %289 = vmatpush.msra.mxu0 0.0
        %290 = vmatpush.msra.mxu0 %v253
        %291 = vmatmul.f32.gmra.mxu0 %v248
        %v292 = vpop.f32.mrf.mxu0
        %v293 = vadd.f32 0.0, %v292
        %294 = vdwg.mxu0
        %v297 = vrot.slane %v293, 4
        %v298 = vsel %vm250, %v273, %v297
        %v300 = vadd.f32 %v163, %v298
        %301 = vst [vmem:[%s162] sm:$0xff] %v300
        %s302 = sand.u32 %s75, 1
        %s303 = scalar_lea.sflag [#allocation5], %s302
        %s304 = sand.u32 %s75, 1
        %s305 = smul.addr %s304, 8
        %s306 = scalar_lea.vmem [#allocation6], %s305
        // Predicated region
        $region33: #{tpu_custom_call.1} parent=27 // pred_check
          %p307 = pneg %p85
        $region34: #{tpu_custom_call.1} parent=27 // pred_check_branch
          %309 = sbr.rel (%p307) target = $region36
        $region35: #{tpu_custom_call.1} parent=27 // pred_region
          %311 = vsyncadd %s303, 0
          %s312 = smul.addr %s20, 2
          %s313 = smul.addr %s312, 4
          %s314 = scalar_lea.hbm %s2, %s313
          %s316 = sshll.u32 %s306, 4
          %s317 = int_to_ptr.vmem [resolvable:$true] %s316
          %s318 = sshll.u32 %s314, 4
          %s319 = int_to_ptr.hbm [resolvable:$true] %s318
          %321 = dma.vmem_to_hbm [thread:$0]  %s317, 128, %s319, %s303
        $region36: #{tpu_custom_call.1} parent=27 // pred_fallthru
          _
      $region28: #{tpu_custom_call.1} parent=5 // pred_fallthru
        _
      %p322 = scmp.le.s32.totalorder 2, %s15
      // Predicated region
      $region37: #{tpu_custom_call.1} parent=5 // pred_check
        %p323 = pneg %p322
      $region38: #{tpu_custom_call.1} parent=5 // pred_check_branch
        %325 = sbr.rel (%p323) target = $region40
      $region39: #{tpu_custom_call.1} parent=5 // pred_region
        %s326 = ssub.s32 %s15, 2
        // Predicated region
        $region41: #{tpu_custom_call.1} parent=39 // pred_check
          %p327 = pneg %p91
        $region42: #{tpu_custom_call.1} parent=39 // pred_check_branch
          %329 = sbr.rel (%p327) target = $region44
        $region43: #{tpu_custom_call.1} parent=39 // pred_region
          %s330 = sand.u32 %s76, 1
          %s331 = scalar_lea.sflag [#allocation5], %s330
          %s332 = sand.u32 %s76, 1
          %s333 = smul.addr %s332, 8
          %s334 = scalar_lea.vmem [#allocation6], %s333
          %336 = dma.done %s331, 128
        $region44: #{tpu_custom_call.1} parent=39 // pred_fallthru
          _
      $region40: #{tpu_custom_call.1} parent=5 // pred_fallthru
        _
    $region6: #{tpu_custom_call.1} parent=1 // loop_footer
      %s19 = sadd.s32 1, %s15
    $region7: #{tpu_custom_call.1} parent=1 // loop_footer_branch
      %14 = sbr.rel target = $region3
    $region8: #{tpu_custom_call.1} parent=1 // loop_exit
      _
    %337 = vsyncpa [#allocation4], 1
    %s338 = scalar_lea.sflag [#allocation4], 1
    %339 = vsyncpa %s338, 1
    %340 = vsyncpa [#allocation5], 1
    %s341 = scalar_lea.sflag [#allocation5], 1
    %342 = vsyncpa %s341, 1

</llo_original>
